<compile_context>
chip_gen: v7x
topology: tpu7x:2x2x1
jax: 0.10.0
libtpu: 0.0.40
codegen_flags: <defaults>
</compile_context>

<pallas_src>
import jax
import jax.numpy as jnp
from jax.experimental import pallas as pl
from jax.experimental.pallas import tpu as pltpu


def _rope_kernel(pos_ref, theta_ref, q_ref, k_ref, qo_ref, ko_ref):
    # pos_ref:   (tR, 1) f32   positions for this row tile
    # theta_ref: (1, D)  f32   pair-repeated, sign-alternated theta
    # q/k refs:  (tR, D) input dtype; outputs same dtype.
    pos = pos_ref[...]                          # (tR, 1)
    theta_s = theta_ref[...]                    # (1, D)
    angles = pos * theta_s                      # (tR, D) f32
    cos = jnp.cos(angles)                       # cos(-x) == cos(x): plain cos everywhere
    sin = jnp.sin(angles)                       # lane 2j: -sin_j, lane 2j+1: +sin_j

    d = angles.shape[-1]
    # Even lanes are exactly the lanes where theta_signed < 0 (theta_j > 0).
    is_even = theta_s < 0.0                     # (1, D) bool, broadcasts over rows

    def rotate(x_ref, o_ref):
        x = x_ref[...]                                   # native dtype (bf16 stays packed)
        x_next = pltpu.roll(x, shift=d - 1, axis=1)      # x_next[i] = x[(i + 1) % D]
        x_prev = pltpu.roll(x, shift=1, axis=1)          # x_prev[i] = x[(i - 1) % D]
        swap = jnp.where(is_even, x_next, x_prev)        # pair swap: 2j <-> 2j+1
        xf = x.astype(jnp.float32)
        sf = swap.astype(jnp.float32)
        # lane 2j:   x[2j]*cos_j   + x[2j+1]*(-sin_j)
        # lane 2j+1: x[2j+1]*cos_j + x[2j]  *(+sin_j)
        o_ref[...] = (xf * cos + sf * sin).astype(o_ref.dtype)

    rotate(q_ref, qo_ref)
    rotate(k_ref, ko_ref)


def _choose_row_tile(n_rows, d, itemsize):
    # Target ~16 MiB for the double-buffered q/k/qo/ko streaming set (plus the
    # lane-padded pos block) -> comfortably inside the 8-24 MiB sweet spot on
    # v5e/v6e (128 MiB VMEM) and v7x (64 MiB VMEM).
    budget = 16 * 1024 * 1024
    per_row = 2 * (4 * d * itemsize) + 2 * (128 * 4)   # 2 pipeline bufs x (4 vec operands + padded pos row)
    tr = budget // max(per_row, 1)
    tr = min(tr, 4096)
    if tr >= n_rows:
        return n_rows
    return max(8, (tr // 8) * 8)


def _physical_vmem_bytes():
    try:
        return int(pltpu.get_tpu_info().vmem_capacity_bytes)
    except Exception:
        return 64 * 1024 * 1024   # conservative (v7x per-TC)


def rotary_positional_encoding(q, k, position_ids, theta):
    """q, k: [B, S, D]; position_ids: [B, S]; theta: [D // 2] float32."""
    B, S, D = q.shape
    Dh = D // 2
    assert k.shape == (B, S, D) and theta.shape == (Dh,)
    assert D % 2 == 0
    # Lane-native rolls and unmasked stores require a 128-multiple feature dim.
    assert D % 128 == 0, "d_model must be a multiple of 128 for this kernel"

    N = B * S

    # Tiny wrapper-side preprocessing (O(D) / O(B*S), free contiguous reshapes):
    #   theta_signed[2j] = -theta[j], theta_signed[2j+1] = +theta[j]
    signs = jnp.tile(jnp.array([-1.0, 1.0], dtype=jnp.float32), Dh)
    theta_signed = (jnp.repeat(theta.astype(jnp.float32), 2) * signs).reshape(1, D)
    pos2 = position_ids.astype(jnp.float32).reshape(N, 1)
    q2 = q.reshape(N, D)
    k2 = k.reshape(N, D)

    itemsize = jnp.dtype(q.dtype).itemsize
    tr = _choose_row_tile(N, D, itemsize)
    grid = (pl.cdiv(N, tr),)

    vec_spec = pl.BlockSpec((tr, D), lambda i: (i, 0))
    pos_spec = pl.BlockSpec((tr, 1), lambda i: (i, 0))
    theta_spec = pl.BlockSpec((1, D), lambda i: (0, 0))

    # Single-buffer bytes per step (q, k, qo, ko + lane-padded pos + sublane-
    # padded theta); the pipeline double-buffers, so multiply by 2 once.
    block_bytes = 4 * tr * D * itemsize + tr * 128 * 4 + 8 * D * 4
    phys_vmem = _physical_vmem_bytes()
    cap = min(48 * 1024 * 1024, max(phys_vmem - 16 * 1024 * 1024, 32 * 1024 * 1024))
    vmem_limit = int(min(max(2 * block_bytes + (2 << 20), 16 << 20), cap))

    cost = pl.CostEstimate(
        flops=8 * N * D,
        transcendentals=2 * N * D,
        bytes_accessed=4 * N * D * itemsize + N * 4 + D * 4,
    )

    q_rot, k_rot = pl.pallas_call(
        _rope_kernel,
        out_shape=(jax.ShapeDtypeStruct((N, D), q.dtype),
                   jax.ShapeDtypeStruct((N, D), k.dtype)),
        grid_spec=pltpu.PrefetchScalarGridSpec(
            num_scalar_prefetch=0,
            grid=grid,
            in_specs=[pos_spec, theta_spec, vec_spec, vec_spec],
            out_specs=[vec_spec, vec_spec],
        ),
        compiler_params=pltpu.CompilerParams(
            dimension_semantics=("parallel",),
            vmem_limit_bytes=vmem_limit,
        ),
        cost_estimate=cost,
    )(pos2, theta_signed, q2, k2)

    return q_rot.reshape(B, S, D), k_rot.reshape(B, S, D)


def _reference(q, k, position_ids, theta):
    angles = position_ids.astype(jnp.float32)[..., None] * theta  # [B, S, Dh]
    cos = jnp.cos(angles)
    sin = jnp.sin(angles)
    qe, qo = q[..., 0::2], q[..., 1::2]
    ke, ko = k[..., 0::2], k[..., 1::2]
    q_rot = jnp.stack([qe * cos - qo * sin, qe * sin + qo * cos], -1).reshape(q.shape)
    k_rot = jnp.stack([ke * cos - ko * sin, ke * sin + ko * cos], -1).reshape(k.shape)
    return q_rot, k_rot


if __name__ == "__main__":
    # Small, lane-dense shapes: batch=2, seq=8, d_model=128.
    B, S, D = 2, 8, 128
    Dh = D // 2

    # Deterministic buffer init matching the module's __init__.
    theta = 10000.0 ** (-2.0 * jnp.arange(0, Dh, dtype=jnp.float32) / D)

    key = jax.random.PRNGKey(0)
    kq, kk = jax.random.split(key)
    q = jax.random.normal(kq, (B, S, D), dtype=jnp.float32)
    k = jax.random.normal(kk, (B, S, D), dtype=jnp.float32)
    position_ids = jnp.tile(jnp.arange(S, dtype=jnp.int32)[None, :], (B, 1))

    q_rot, k_rot = rotary_positional_encoding(q, k, position_ids, theta)
    jax.block_until_ready((q_rot, k_rot))

    q_ref, k_ref = _reference(q, k, position_ids, theta)
    assert jnp.allclose(q_rot, q_ref, atol=1e-5, rtol=1e-5)
    assert jnp.allclose(k_rot, k_ref, atol=1e-5, rtol=1e-5)

    print("KERNEL_OK")
</pallas_src>

<mosaic_0001>
module attributes {stable_mosaic.version = 11 : i64} {
  func.func @_rope_kernel(%arg0: i32, %arg1: memref<16x1xf32, #tpu.memory_space<vmem>>, %arg2: memref<1x128xf32, #tpu.memory_space<vmem>>, %arg3: memref<16x128xf32, #tpu.memory_space<vmem>>, %arg4: memref<16x128xf32, #tpu.memory_space<vmem>>, %arg5: memref<16x128xf32, #tpu.memory_space<vmem>>, %arg6: memref<16x128xf32, #tpu.memory_space<vmem>>) attributes {dimension_semantics = [#tpu.dimension_semantics<parallel>], iteration_bounds = array<i64: 1>, scalar_prefetch = 0 : i64, scratch_operands = 0 : i64, tpu.core_type = #tpu.core_type<tc>, window_params = [{transform_indices = @transform_0, window_bounds = array<i64: 16, 1>}, {pipeline_mode = #tpu.pipeline_mode<synchronous>, transform_indices = @transform_1, window_bounds = array<i64: 1, 128>}, {transform_indices = @transform_2, window_bounds = array<i64: 16, 128>}, {transform_indices = @transform_3, window_bounds = array<i64: 16, 128>}, {transform_indices = @transform_4, window_bounds = array<i64: 16, 128>}, {transform_indices = @transform_5, window_bounds = array<i64: 16, 128>}]} {
    %c0 = arith.constant 0 : index
    %c0_0 = arith.constant 0 : index
    %0 = vector.load %arg1[%c0, %c0_0] : memref<16x1xf32, #tpu.memory_space<vmem>>, vector<16x1xf32>
    %c0_1 = arith.constant 0 : index
    %c0_2 = arith.constant 0 : index
    %1 = vector.load %arg2[%c0_1, %c0_2] : memref<1x128xf32, #tpu.memory_space<vmem>>, vector<1x128xf32>
    %2 = vector.broadcast %0 : vector<16x1xf32> to vector<16x128xf32>
    %3 = vector.broadcast %1 : vector<1x128xf32> to vector<16x128xf32>
    %4 = arith.mulf %2, %3 : vector<16x128xf32>
    %5 = math.cos %4 : vector<16x128xf32>
    %6 = math.sin %4 : vector<16x128xf32>
    %cst = arith.constant 0.000000e+00 : f32
    %7 = vector.broadcast %cst : f32 to vector<1x128xf32>
    %8 = arith.cmpf olt, %1, %7 : vector<1x128xf32>
    %c0_3 = arith.constant 0 : index
    %c0_4 = arith.constant 0 : index
    %9 = vector.load %arg3[%c0_3, %c0_4] : memref<16x128xf32, #tpu.memory_space<vmem>>, vector<16x128xf32>
    %c127_i32 = arith.constant 127 : i32
    %10 = tpu.dynamic_rotate %9 by %c127_i32 dim 1 : vector<16x128xf32>, i32 -> vector<16x128xf32>
    %c1_i32 = arith.constant 1 : i32
    %11 = tpu.dynamic_rotate %9 by %c1_i32 dim 1 : vector<16x128xf32>, i32 -> vector<16x128xf32>
    %12 = vector.shape_cast %8 : vector<1x128xi1> to vector<1x128xi1>
    %13 = vector.broadcast %12 : vector<1x128xi1> to vector<16x128xi1>
    %14 = arith.select %13, %10, %11 : vector<16x128xi1>, vector<16x128xf32>
    %15 = arith.mulf %9, %5 : vector<16x128xf32>
    %16 = arith.mulf %14, %6 : vector<16x128xf32>
    %17 = arith.addf %15, %16 : vector<16x128xf32>
    %c0_5 = arith.constant 0 : index
    %c0_6 = arith.constant 0 : index
    %18 = vector.load %arg5[%c0_5, %c0_6] : memref<16x128xf32, #tpu.memory_space<vmem>>, vector<16x128xf32>
    tpu.vector_store %arg5[%c0_5, %c0_6], %17 {strides = array<i32>} : memref<16x128xf32, #tpu.memory_space<vmem>>, vector<16x128xf32>,
    %c0_7 = arith.constant 0 : index
    %c0_8 = arith.constant 0 : index
    %19 = vector.load %arg4[%c0_7, %c0_8] : memref<16x128xf32, #tpu.memory_space<vmem>>, vector<16x128xf32>
    %c127_i32_9 = arith.constant 127 : i32
    %20 = tpu.dynamic_rotate %19 by %c127_i32_9 dim 1 : vector<16x128xf32>, i32 -> vector<16x128xf32>
    %c1_i32_10 = arith.constant 1 : i32
    %21 = tpu.dynamic_rotate %19 by %c1_i32_10 dim 1 : vector<16x128xf32>, i32 -> vector<16x128xf32>
    %22 = vector.shape_cast %8 : vector<1x128xi1> to vector<1x128xi1>
    %23 = vector.broadcast %22 : vector<1x128xi1> to vector<16x128xi1>
    %24 = arith.select %23, %20, %21 : vector<16x128xi1>, vector<16x128xf32>
    %25 = arith.mulf %19, %5 : vector<16x128xf32>
    %26 = arith.mulf %24, %6 : vector<16x128xf32>
    %27 = arith.addf %25, %26 : vector<16x128xf32>
    %c0_11 = arith.constant 0 : index
    %c0_12 = arith.constant 0 : index
    %28 = vector.load %arg6[%c0_11, %c0_12] : memref<16x128xf32, #tpu.memory_space<vmem>>, vector<16x128xf32>
    tpu.vector_store %arg6[%c0_11, %c0_12], %27 {strides = array<i32>} : memref<16x128xf32, #tpu.memory_space<vmem>>, vector<16x128xf32>,
    return
  }
  func.func @transform_0(%arg0: i32) -> (i32, i32) {
    %c0_i32 = arith.constant 0 : i32
    %c0_i32_0 = arith.constant 0 : i32
    return %arg0, %c0_i32 : i32, i32
  }
  func.func @transform_1(%arg0: i32) -> (i32, i32) {
    %c0_i32 = arith.constant 0 : i32
    %c0_i32_0 = arith.constant 0 : i32
    %c0_i32_1 = arith.constant 0 : i32
    return %c0_i32, %c0_i32_0 : i32, i32
  }
  func.func @transform_2(%arg0: i32) -> (i32, i32) {
    %c0_i32 = arith.constant 0 : i32
    %c0_i32_0 = arith.constant 0 : i32
    return %arg0, %c0_i32 : i32, i32
  }
  func.func @transform_3(%arg0: i32) -> (i32, i32) {
    %c0_i32 = arith.constant 0 : i32
    %c0_i32_0 = arith.constant 0 : i32
    return %arg0, %c0_i32 : i32, i32
  }
  func.func @transform_4(%arg0: i32) -> (i32, i32) {
    %c0_i32 = arith.constant 0 : i32
    %c0_i32_0 = arith.constant 0 : i32
    return %arg0, %c0_i32 : i32, i32
  }
  func.func @transform_5(%arg0: i32) -> (i32, i32) {
    %c0_i32 = arith.constant 0 : i32
    %c0_i32_0 = arith.constant 0 : i32
    return %arg0, %c0_i32 : i32, i32
  }
}

</mosaic_0001>

<llo_original>
// kernel: tpu_custom_call.1
$region0: #{tpu_custom_call.1}
  #allocation0 [shape = 'u32[]', space=smem, size = 0x4, offset = 0x4, fixed_abs, tag = 'smem constant byte address 0x4 - core index']
  #allocation1 [shape = 'u32[144,128]{1,0:T(1,128)}', space=vmem, size = 0x12000, scoped, tag = 'internal scratch']
  %s0 = inlined_call_operand.vmem [shape: f32[16,1], index: 0, kind: input, shape index: {}]
  %s1 = inlined_call_operand.vmem [shape: f32[1,128], index: 1, kind: input, shape index: {}]
  %s2 = inlined_call_operand.vmem [shape: f32[16,128], index: 2, kind: input, shape index: {}]
  %s3 = inlined_call_operand.hbm [shape: f32[16,128], index: 3, kind: input, shape index: {}]
  %s4 = inlined_call_operand.hbm [shape: f32[16,128], index: 4, kind: output, shape index: {0}]
  %s5 = inlined_call_operand.hbm [shape: f32[16,128], index: 5, kind: output, shape index: {1}]
  %6 = xla_tuple %s4, %s5
  %s7 = sld [smem:[#allocation0]]
  $region38: #{tpu_custom_call.1} parent=0
    _
  %s9 = ssub.s32 1, %s7
  %s10 = scalar_select 0, %s9, %s7
  $region1: #{tpu_custom_call.1} parent=0
    #allocation2 [shape = 'u8[8192]{0}', space=vmem, size = 0x2000, scoped, tag = 'input window, operand 3, single buffered']
    #allocation3 [shape = 's32[1]{0}', space=sflag, size = 0x4, scoped, tag = 'scoped memory for tpu_custom_call.1']
    #allocation4 [shape = 's32[1]{0}', space=sflag, size = 0x4, scoped, tag = 'scoped memory for tpu_custom_call.1']
    #allocation5 [shape = 'u8[8192]{0}', space=vmem, size = 0x2000, scoped, tag = 'output window, operand 0, single buffered']
    #allocation6 [shape = 'u8[8192]{0}', space=vmem, size = 0x2000, scoped, tag = 'output window, operand 1, single buffered']
    #allocation7 [shape = 's32[1]{0}', space=sflag, size = 0x4, scoped, tag = 'scoped memory for tpu_custom_call.1']
    %11 = vsyncpa [#allocation3], 0
    %12 = vsyncpa [#allocation4], 0
    %13 = vsyncpa [#allocation7], 0
    // Predicated region
    $region2: #{tpu_custom_call.1} parent=1 // pred_check
      _
    $region3: #{tpu_custom_call.1} parent=1 // pred_check_branch
      %15 = sbr.rel (0) target = $region5
    $region4: #{tpu_custom_call.1} parent=1 // pred_region
      _
    $region5: #{tpu_custom_call.1} parent=1 // pred_fallthru
      _
    // Predicated region
    $region6: #{tpu_custom_call.1} parent=1 // pred_check
      _
    $region7: #{tpu_custom_call.1} parent=1 // pred_check_branch
      %17 = sbr.rel (0) target = $region9
    $region8: #{tpu_custom_call.1} parent=1 // pred_region
      _
    $region9: #{tpu_custom_call.1} parent=1 // pred_fallthru
      _
    // Predicated region
    $region10: #{tpu_custom_call.1} parent=1 // pred_check
      _
    $region11: #{tpu_custom_call.1} parent=1 // pred_check_branch
      %19 = sbr.rel (0) target = $region13
    $region12: #{tpu_custom_call.1} parent=1 // pred_region
      _
    $region13: #{tpu_custom_call.1} parent=1 // pred_fallthru
      _
    // Predicated region
    $region14: #{tpu_custom_call.1} parent=1 // pred_check
      _
    $region15: #{tpu_custom_call.1} parent=1 // pred_check_branch
      %21 = sbr.rel (0) target = $region17
    $region16: #{tpu_custom_call.1} parent=1 // pred_region
      %s23 = ssub.s32 256, 256
      %24 = vsyncadd [#allocation3], %s23
      %s25 = sshll.u32 [#allocation2], 4
      %s26 = int_to_ptr.vmem [resolvable:$true] %s25
      %31 = dma.hbm_to_vmem [thread:$0]  %s3, 256, %s26, [#allocation3], 128, 128, 8
    $region17: #{tpu_custom_call.1} parent=1 // pred_fallthru
      _
    // Predicated region
    $region18: #{tpu_custom_call.1} parent=1 // pred_check
      _
    $region19: #{tpu_custom_call.1} parent=1 // pred_check_branch
      %33 = sbr.rel (0) target = $region21
    $region20: #{tpu_custom_call.1} parent=1 // pred_region
      %34 = dma.done [#allocation3], 256
    $region21: #{tpu_custom_call.1} parent=1 // pred_fallthru
      _
    %v35 = vld [vmem:[%s0] sm:$0xff]
    %v36 = vld [vmem:[%s0 + $0x8] sm:$0xff]
    %v37 = vld [vmem:[%s1] sm:$0x1]
    %39 = vset.pattern.permute.xlu0 0
    %40 = vperm.xlu0 %39, %v35
    %v41 = vpop.permute.xlu0 %40
    %44 = vset.pattern.permute.xlu0 0
    %45 = vperm.xlu0 %44, %v36
    %v46 = vpop.permute.xlu0 %45
    %v49 = vlaneseq
    %v50 = vshrl.u32 %v49, 7
    %v51 = vsub.s32 0, %v50
    %v52 = vrot.slane %v37, %v51
    %v54 = vmul.f32 %v41, %v52
    %v55 = vmul.f32 %v46, %v52
    %v56 = vand.u32 2147483647, %v54
    %vm57 = vcmp.le.f32.partialorder %v56, 0.7853982
    %vm58 = vcmp.lt.s32.totalorder %v54, 0
    %v59 = vand.u32 %v54, 2139095040
    %v60 = vshrl.u32 %v59, 23
    %v61 = vsub.s32 %v60, 127
    %v62 = vand.u32 2147483647, %v54
    %v63 = vand.u32 %v62, 8388607
    %v64 = vor.u32 %v63, 8388608
    %v65 = vsub.s32 0, %v64
    %v66 = vadd.s32 %v61, 1
    %vm67 = vcmp.gt.s32.totalorder %v66, 0
    %v68 = vsel %vm67, %v66, 0
    %v69 = vshrl.u32 %v68, 5
    %v70 = vand.u32 %v68, 31
    %v71 = vsub.s32 32, %v70
    %v72 = vshrl.u32 683565275, %v71
    %v73 = vshll.u32 683565275, %v70
    %v74 = vshrl.u32 2475754826, %v71
    %v75 = vor.u32 %v73, %v74
    %v76 = vshll.u32 2475754826, %v70
    %v77 = vshrl.u32 2131351028, %v71
    %v78 = vor.u32 %v76, %v77
    %v79 = vshll.u32 2131351028, %v70
    %v80 = vshrl.u32 2102212464, %v71
    %v81 = vor.u32 %v79, %v80
    %v82 = vshll.u32 2102212464, %v70
    %v83 = vshrl.u32 920167782, %v71
    %v84 = vor.u32 %v82, %v83
    %v85 = vshll.u32 920167782, %v70
    %v86 = vshrl.u32 1326507024, %v71
    %v87 = vor.u32 %v85, %v86
    %vm88 = vcmp.lt.s32.totalorder %v69, 1
    %vm89 = vcmp.lt.s32.totalorder %v69, 2
    %vm90 = vcmp.lt.s32.totalorder %v69, 3
    %vm91 = vcmp.lt.s32.totalorder %v69, 4
    %v92 = vsel %vm88, %v72, %v75
    %v93 = vsel %vm91, %v81, 2102212464
    %v94 = vsel %vm90, %v78, %v93
    %v95 = vsel %vm89, %v92, %v94
    %v96 = vsel %vm88, %v75, %v78
    %v97 = vsel %vm91, %v84, 920167782
    %v98 = vsel %vm90, %v81, %v97
    %v99 = vsel %vm89, %v96, %v98
    %v100 = vsel %vm88, %v78, %v81
    %v101 = vsel %vm91, %v87, 1326507024
    %v102 = vsel %vm90, %v84, %v101
    %v103 = vsel %vm89, %v100, %v102
    %v104 = vshll.u32 %v64, 8
    %v105 = vmul.u32.u64.compose %v104, %v103
    %v106 = vextract.low.u32 %v105
    %v107 = vextract.high.u32 %v105
    %v108 = vmul.u32.u64.compose %v104, %v99
    %v109 = vextract.low.u32 %v108
    %v110 = vextract.high.u32 %v108
    %v111 = vmul.u32 %v104, %v95
    %v112 = vadd.s32 %v107, %v109
    %vm113 = vc.u32 %v107, %v109
    %v114 = vadd.s32 %v110, 1
    %v115 = vsel %vm113, %v114, %v110
    %v116 = vadd.s32 %v111, %v115
    %v117 = vadd.s32 %v116, 536870912
    %v118 = vshrl.u32 %v117, 30
    %v119 = vshll.u32 %v118, 30
    %v120 = vsub.s32 %v116, %v119
    %vm121 = vcmp.lt.s32.totalorder %v120, 0
    %v122 = vsub.s32 0, %v120
    %v123 = vsel %vm121, %v122, %v120
    %v124 = vclz %v123
    %v125 = vsub.s32 %v124, 2
    %vm126 = vcmp.gt.s32.totalorder 0, %v125
    %v127 = vsel %vm126, 0, %v125
    %v128 = vsub.s32 32, %v127
    %v129 = vshll.u32 %v120, %v127
    %v130 = vshrl.u32 %v112, %v128
    %v131 = vor.u32 %v129, %v130
    %v132 = vsub.s32 4294967266, %v127
    %v133 = vadd.s32 %v132, 127
    %v134 = vshll.u32 %v133, 23
    %v135 = vor.u32 4788187, %v134
    %v136 = vand.u32 2147483647, %v135
    %v138 = vcvt.s32.f32 %v131
    %v139 = vmul.f32 %v138, %v136
    %v140 = vxor.u32 %v139, 2147483648
    %v141 = vsel %vm58, %v140, %v139
    %v142 = vsub.s32 4, %v118
    %v143 = vsel %vm58, %v142, %v118
    %v144 = vsel %vm57, %v54, %v141
    %v145 = vsel %vm57, 0, %v143
    %v146 = vcosq.f32.pop %v144
    %v147 = vsinq.f32.pop %v144
    %vm148 = vweird.f32 %v54
    %v149 = vand.u32 %v145, 3
    %vm150 = vcmp.lt.s32.totalorder %v149, 2
    %vm151 = vcmp.eq.s32.totalorder %v149, 0
    %v152 = vxor.u32 %v147, 2147483648
    %v153 = vsel %vm151, %v146, %v152
    %vm154 = vcmp.eq.s32.totalorder %v149, 2
    %v155 = vxor.u32 %v146, 2147483648
    %v156 = vsel %vm154, %v155, %v147
    %v157 = vsel %vm150, %v153, %v156
    %v158 = vsel %vm148, nan, %v157
    %v159 = vand.u32 2147483647, %v55
    %vm160 = vcmp.le.f32.partialorder %v159, 0.7853982
    %vm161 = vcmp.lt.s32.totalorder %v55, 0
    %v162 = vand.u32 %v55, 2139095040
    %v163 = vshrl.u32 %v162, 23
    %v164 = vsub.s32 %v163, 127
    %v165 = vand.u32 2147483647, %v55
    %v166 = vand.u32 %v165, 8388607
    %v167 = vor.u32 %v166, 8388608
    %v168 = vsub.s32 0, %v167
    %v169 = vadd.s32 %v164, 1
    %vm170 = vcmp.gt.s32.totalorder %v169, 0
    %v171 = vsel %vm170, %v169, 0
    %v172 = vshrl.u32 %v171, 5
    %v173 = vand.u32 %v171, 31
    %v174 = vsub.s32 32, %v173
    %v175 = vshrl.u32 683565275, %v174
    %v176 = vshll.u32 683565275, %v173
    %v177 = vshrl.u32 2475754826, %v174
    %v178 = vor.u32 %v176, %v177
    %v179 = vshll.u32 2475754826, %v173
    %v180 = vshrl.u32 2131351028, %v174
    %v181 = vor.u32 %v179, %v180
    %v182 = vshll.u32 2131351028, %v173
    %v183 = vshrl.u32 2102212464, %v174
    %v184 = vor.u32 %v182, %v183
    %v185 = vshll.u32 2102212464, %v173
    %v186 = vshrl.u32 920167782, %v174
    %v187 = vor.u32 %v185, %v186
    %v188 = vshll.u32 920167782, %v173
    %v189 = vshrl.u32 1326507024, %v174
    %v190 = vor.u32 %v188, %v189
    %vm191 = vcmp.lt.s32.totalorder %v172, 1
    %vm192 = vcmp.lt.s32.totalorder %v172, 2
    %vm193 = vcmp.lt.s32.totalorder %v172, 3
    %vm194 = vcmp.lt.s32.totalorder %v172, 4
    %v195 = vsel %vm191, %v175, %v178
    %v196 = vsel %vm194, %v184, 2102212464
    %v197 = vsel %vm193, %v181, %v196
    %v198 = vsel %vm192, %v195, %v197
    %v199 = vsel %vm191, %v178, %v181
    %v200 = vsel %vm194, %v187, 920167782
    %v201 = vsel %vm193, %v184, %v200
    %v202 = vsel %vm192, %v199, %v201
    %v203 = vsel %vm191, %v181, %v184
    %v204 = vsel %vm194, %v190, 1326507024
    %v205 = vsel %vm193, %v187, %v204
    %v206 = vsel %vm192, %v203, %v205
    %v207 = vshll.u32 %v167, 8
    %v208 = vmul.u32.u64.compose %v207, %v206
    %v209 = vextract.low.u32 %v208
    %v210 = vextract.high.u32 %v208
    %v211 = vmul.u32.u64.compose %v207, %v202
    %v212 = vextract.low.u32 %v211
    %v213 = vextract.high.u32 %v211
    %v214 = vmul.u32 %v207, %v198
    %v215 = vadd.s32 %v210, %v212
    %vm216 = vc.u32 %v210, %v212
    %v217 = vadd.s32 %v213, 1
    %v218 = vsel %vm216, %v217, %v213
    %v219 = vadd.s32 %v214, %v218
    %v220 = vadd.s32 %v219, 536870912
    %v221 = vshrl.u32 %v220, 30
    %v222 = vshll.u32 %v221, 30
    %v223 = vsub.s32 %v219, %v222
    %vm224 = vcmp.lt.s32.totalorder %v223, 0
    %v225 = vsub.s32 0, %v223
    %v226 = vsel %vm224, %v225, %v223
    %v227 = vclz %v226
    %v228 = vsub.s32 %v227, 2
    %vm229 = vcmp.gt.s32.totalorder 0, %v228
    %v230 = vsel %vm229, 0, %v228
    %v231 = vsub.s32 32, %v230
    %v232 = vshll.u32 %v223, %v230
    %v233 = vshrl.u32 %v215, %v231
    %v234 = vor.u32 %v232, %v233
    %v235 = vsub.s32 4294967266, %v230
    %v236 = vadd.s32 %v235, 127
    %v237 = vshll.u32 %v236, 23
    %v238 = vor.u32 4788187, %v237
    %v239 = vand.u32 2147483647, %v238
    %v241 = vcvt.s32.f32 %v234
    %v242 = vmul.f32 %v241, %v239
    %v243 = vxor.u32 %v242, 2147483648
    %v244 = vsel %vm161, %v243, %v242
    %v245 = vsub.s32 4, %v221
    %v246 = vsel %vm161, %v245, %v221
    %v247 = vsel %vm160, %v55, %v244
    %v248 = vsel %vm160, 0, %v246
    %v249 = vcosq.f32.pop %v247
    %v250 = vsinq.f32.pop %v247
    %vm251 = vweird.f32 %v55
    %v252 = vand.u32 %v248, 3
    %vm253 = vcmp.lt.s32.totalorder %v252, 2
    %vm254 = vcmp.eq.s32.totalorder %v252, 0
    %v255 = vxor.u32 %v250, 2147483648
    %v256 = vsel %vm254, %v249, %v255
    %vm257 = vcmp.eq.s32.totalorder %v252, 2
    %v258 = vxor.u32 %v249, 2147483648
    %v259 = vsel %vm257, %v258, %v250
    %v260 = vsel %vm253, %v256, %v259
    %v261 = vsel %vm251, nan, %v260
    %v262 = vand.u32 2147483647, %v54
    %vm263 = vcmp.le.f32.partialorder %v262, 0.7853982
    %vm264 = vcmp.lt.s32.totalorder %v54, 0
    %v265 = vand.u32 %v54, 2139095040
    %v266 = vshrl.u32 %v265, 23
    %v267 = vsub.s32 %v266, 127
    %v268 = vand.u32 2147483647, %v54
    %v269 = vand.u32 %v268, 8388607
    %v270 = vor.u32 %v269, 8388608
    %v271 = vsub.s32 0, %v270
    %v272 = vadd.s32 %v267, 1
    %vm273 = vcmp.gt.s32.totalorder %v272, 0
    %v274 = vsel %vm273, %v272, 0
    %v275 = vshrl.u32 %v274, 5
    %v276 = vand.u32 %v274, 31
    %v277 = vsub.s32 32, %v276
    %v278 = vshrl.u32 683565275, %v277
    %v279 = vshll.u32 683565275, %v276
    %v280 = vshrl.u32 2475754826, %v277
    %v281 = vor.u32 %v279, %v280
    %v282 = vshll.u32 2475754826, %v276
    %v283 = vshrl.u32 2131351028, %v277
    %v284 = vor.u32 %v282, %v283
    %v285 = vshll.u32 2131351028, %v276
    %v286 = vshrl.u32 2102212464, %v277
    %v287 = vor.u32 %v285, %v286
    %v288 = vshll.u32 2102212464, %v276
    %v289 = vshrl.u32 920167782, %v277
    %v290 = vor.u32 %v288, %v289
    %v291 = vshll.u32 920167782, %v276
    %v292 = vshrl.u32 1326507024, %v277
    %v293 = vor.u32 %v291, %v292
    %vm294 = vcmp.lt.s32.totalorder %v275, 1
    %vm295 = vcmp.lt.s32.totalorder %v275, 2
    %vm296 = vcmp.lt.s32.totalorder %v275, 3
    %vm297 = vcmp.lt.s32.totalorder %v275, 4
    %v298 = vsel %vm294, %v278, %v281
    %v299 = vsel %vm297, %v287, 2102212464
    %v300 = vsel %vm296, %v284, %v299
    %v301 = vsel %vm295, %v298, %v300
    %v302 = vsel %vm294, %v281, %v284
    %v303 = vsel %vm297, %v290, 920167782
    %v304 = vsel %vm296, %v287, %v303
    %v305 = vsel %vm295, %v302, %v304
    %v306 = vsel %vm294, %v284, %v287
    %v307 = vsel %vm297, %v293, 1326507024
    %v308 = vsel %vm296, %v290, %v307
    %v309 = vsel %vm295, %v306, %v308
    %v310 = vshll.u32 %v270, 8
    %v311 = vmul.u32.u64.compose %v310, %v309
    %v312 = vextract.low.u32 %v311
    %v313 = vextract.high.u32 %v311
    %v314 = vmul.u32.u64.compose %v310, %v305
    %v315 = vextract.low.u32 %v314
    %v316 = vextract.high.u32 %v314
    %v317 = vmul.u32 %v310, %v301
    %v318 = vadd.s32 %v313, %v315
    %vm319 = vc.u32 %v313, %v315
    %v320 = vadd.s32 %v316, 1
    %v321 = vsel %vm319, %v320, %v316
    %v322 = vadd.s32 %v317, %v321
    %v323 = vadd.s32 %v322, 536870912
    %v324 = vshrl.u32 %v323, 30
    %v325 = vshll.u32 %v324, 30
    %v326 = vsub.s32 %v322, %v325
    %vm327 = vcmp.lt.s32.totalorder %v326, 0
    %v328 = vsub.s32 0, %v326
    %v329 = vsel %vm327, %v328, %v326
    %v330 = vclz %v329
    %v331 = vsub.s32 %v330, 2
    %vm332 = vcmp.gt.s32.totalorder 0, %v331
    %v333 = vsel %vm332, 0, %v331
    %v334 = vsub.s32 32, %v333
    %v335 = vshll.u32 %v326, %v333
    %v336 = vshrl.u32 %v318, %v334
    %v337 = vor.u32 %v335, %v336
    %v338 = vsub.s32 4294967266, %v333
    %v339 = vadd.s32 %v338, 127
    %v340 = vshll.u32 %v339, 23
    %v341 = vor.u32 4788187, %v340
    %v342 = vand.u32 2147483647, %v341
    %v344 = vcvt.s32.f32 %v337
    %v345 = vmul.f32 %v344, %v342
    %v346 = vxor.u32 %v345, 2147483648
    %v347 = vsel %vm264, %v346, %v345
    %v348 = vsub.s32 4, %v324
    %v349 = vsel %vm264, %v348, %v324
    %v350 = vsel %vm263, %v54, %v347
    %v351 = vsel %vm263, 0, %v349
    %v352 = vcosq.f32.pop %v350
    %v353 = vsinq.f32.pop %v350
    %vm354 = vweird.f32 %v54
    %v355 = vadd.s32 %v351, 3
    %v356 = vand.u32 %v355, 3
    %vm357 = vcmp.lt.s32.totalorder %v356, 2
    %vm358 = vcmp.eq.s32.totalorder %v356, 0
    %v359 = vxor.u32 %v353, 2147483648
    %v360 = vsel %vm358, %v352, %v359
    %vm361 = vcmp.eq.s32.totalorder %v356, 2
    %v362 = vxor.u32 %v352, 2147483648
    %v363 = vsel %vm361, %v362, %v353
    %v364 = vsel %vm357, %v360, %v363
    %v365 = vsel %vm354, nan, %v364
    %v366 = vand.u32 2147483647, %v55
    %vm367 = vcmp.le.f32.partialorder %v366, 0.7853982
    %vm368 = vcmp.lt.s32.totalorder %v55, 0
    %v369 = vand.u32 %v55, 2139095040
    %v370 = vshrl.u32 %v369, 23
    %v371 = vsub.s32 %v370, 127
    %v372 = vand.u32 2147483647, %v55
    %v373 = vand.u32 %v372, 8388607
    %v374 = vor.u32 %v373, 8388608
    %v375 = vsub.s32 0, %v374
    %v376 = vadd.s32 %v371, 1
    %vm377 = vcmp.gt.s32.totalorder %v376, 0
    %v378 = vsel %vm377, %v376, 0
    %v379 = vshrl.u32 %v378, 5
    %v380 = vand.u32 %v378, 31
    %v381 = vsub.s32 32, %v380
    %v382 = vshrl.u32 683565275, %v381
    %v383 = vshll.u32 683565275, %v380
    %v384 = vshrl.u32 2475754826, %v381
    %v385 = vor.u32 %v383, %v384
    %v386 = vshll.u32 2475754826, %v380
    %v387 = vshrl.u32 2131351028, %v381
    %v388 = vor.u32 %v386, %v387
    %v389 = vshll.u32 2131351028, %v380
    %v390 = vshrl.u32 2102212464, %v381
    %v391 = vor.u32 %v389, %v390
    %v392 = vshll.u32 2102212464, %v380
    %v393 = vshrl.u32 920167782, %v381
    %v394 = vor.u32 %v392, %v393
    %v395 = vshll.u32 920167782, %v380
    %v396 = vshrl.u32 1326507024, %v381
    %v397 = vor.u32 %v395, %v396
    %vm398 = vcmp.lt.s32.totalorder %v379, 1
    %vm399 = vcmp.lt.s32.totalorder %v379, 2
    %vm400 = vcmp.lt.s32.totalorder %v379, 3
    %vm401 = vcmp.lt.s32.totalorder %v379, 4
    %v402 = vsel %vm398, %v382, %v385
    %v403 = vsel %vm401, %v391, 2102212464
    %v404 = vsel %vm400, %v388, %v403
    %v405 = vsel %vm399, %v402, %v404
    %v406 = vsel %vm398, %v385, %v388
    %v407 = vsel %vm401, %v394, 920167782
    %v408 = vsel %vm400, %v391, %v407
    %v409 = vsel %vm399, %v406, %v408
    %v410 = vsel %vm398, %v388, %v391
    %v411 = vsel %vm401, %v397, 1326507024
    %v412 = vsel %vm400, %v394, %v411
    %v413 = vsel %vm399, %v410, %v412
    %v414 = vshll.u32 %v374, 8
    %v415 = vmul.u32.u64.compose %v414, %v413
    %v416 = vextract.low.u32 %v415
    %v417 = vextract.high.u32 %v415
    %v418 = vmul.u32.u64.compose %v414, %v409
    %v419 = vextract.low.u32 %v418
    %v420 = vextract.high.u32 %v418
    %v421 = vmul.u32 %v414, %v405
    %v422 = vadd.s32 %v417, %v419
    %vm423 = vc.u32 %v417, %v419
    %v424 = vadd.s32 %v420, 1
    %v425 = vsel %vm423, %v424, %v420
    %v426 = vadd.s32 %v421, %v425
    %v427 = vadd.s32 %v426, 536870912
    %v428 = vshrl.u32 %v427, 30
    %v429 = vshll.u32 %v428, 30
    %v430 = vsub.s32 %v426, %v429
    %vm431 = vcmp.lt.s32.totalorder %v430, 0
    %v432 = vsub.s32 0, %v430
    %v433 = vsel %vm431, %v432, %v430
    %v434 = vclz %v433
    %v435 = vsub.s32 %v434, 2
    %vm436 = vcmp.gt.s32.totalorder 0, %v435
    %v437 = vsel %vm436, 0, %v435
    %v438 = vsub.s32 32, %v437
    %v439 = vshll.u32 %v430, %v437
    %v440 = vshrl.u32 %v422, %v438
    %v441 = vor.u32 %v439, %v440
    %v442 = vsub.s32 4294967266, %v437
    %v443 = vadd.s32 %v442, 127
    %v444 = vshll.u32 %v443, 23
    %v445 = vor.u32 4788187, %v444
    %v446 = vand.u32 2147483647, %v445
    %v448 = vcvt.s32.f32 %v441
    %v449 = vmul.f32 %v448, %v446
    %v450 = vxor.u32 %v449, 2147483648
    %v451 = vsel %vm368, %v450, %v449
    %v452 = vsub.s32 4, %v428
    %v453 = vsel %vm368, %v452, %v428
    %v454 = vsel %vm367, %v55, %v451
    %v455 = vsel %vm367, 0, %v453
    %v456 = vcosq.f32.pop %v454
    %v457 = vsinq.f32.pop %v454
    %vm458 = vweird.f32 %v55
    %v459 = vadd.s32 %v455, 3
    %v460 = vand.u32 %v459, 3
    %vm461 = vcmp.lt.s32.totalorder %v460, 2
    %vm462 = vcmp.eq.s32.totalorder %v460, 0
    %v463 = vxor.u32 %v457, 2147483648
    %v464 = vsel %vm462, %v456, %v463
    %vm465 = vcmp.eq.s32.totalorder %v460, 2
    %v466 = vxor.u32 %v456, 2147483648
    %v467 = vsel %vm465, %v466, %v457
    %v468 = vsel %vm461, %v464, %v467
    %v469 = vsel %vm458, nan, %v468
    %vm470 = vcmp.lt.f32.partialorder %v37, 0.0
    %v471 = vld [vmem:[%s2] sm:$0xff]
    %v472 = vld [vmem:[%s2 + $0x8] sm:$0xff]
    %473 = vrot.lane.b32.xlu0 %v471, 127
    %v474 = vpop.permute.xlu0 %473
    %475 = vrot.lane.b32.xlu0 %v472, 127
    %v476 = vpop.permute.xlu0 %475
    %477 = vrot.lane.b32.xlu0 %v471, 1
    %v478 = vpop.permute.xlu0 %477
    %479 = vrot.lane.b32.xlu0 %v472, 1
    %v480 = vpop.permute.xlu0 %479
    %v481 = vsel %vm470, 1, 0
    %v482 = vlaneseq
    %v483 = vshrl.u32 %v482, 7
    %v484 = vsub.s32 0, %v483
    %v485 = vrot.slane %v481, %v484
    %vm486 = vcmp.eq.s32.totalorder %v485, 1
    %v487 = vsel %vm486, %v474, %v478
    %v488 = vsel %vm486, %v476, %v480
    %v489 = vmul.f32 %v471, %v158
    %v490 = vmul.f32 %v472, %v261
    %v491 = vmul.f32 %v487, %v365
    %v492 = vmul.f32 %v488, %v469
    %v493 = vadd.f32 %v489, %v491
    %v494 = vadd.f32 %v490, %v492
    %495 = vst [vmem:[#allocation5] sm:$0xff] %v493
    %496 = vst [vmem:[#allocation5 + $0x8] sm:$0xff] %v494
    %v497 = vld [vmem:[#allocation2] sm:$0xff]
    %v498 = vld [vmem:[#allocation2 + $0x8] sm:$0xff]
    %499 = vrot.lane.b32.xlu0 %v497, 127
    %v500 = vpop.permute.xlu0 %499
    %501 = vrot.lane.b32.xlu0 %v498, 127
    %v502 = vpop.permute.xlu0 %501
    %503 = vrot.lane.b32.xlu0 %v497, 1
    %v504 = vpop.permute.xlu0 %503
    %505 = vrot.lane.b32.xlu0 %v498, 1
    %v506 = vpop.permute.xlu0 %505
    %v507 = vsel %vm486, %v500, %v504
    %v508 = vsel %vm486, %v502, %v506
    %v509 = vmul.f32 %v497, %v158
    %v510 = vmul.f32 %v498, %v261
    %v511 = vmul.f32 %v507, %v365
    %v512 = vmul.f32 %v508, %v469
    %v513 = vadd.f32 %v509, %v511
    %v514 = vadd.f32 %v510, %v512
    %515 = vst [vmem:[#allocation6] sm:$0xff] %v513
    %516 = vst [vmem:[#allocation6 + $0x8] sm:$0xff] %v514
    // Predicated region
    $region22: #{tpu_custom_call.1} parent=1 // pred_check
      _
    $region23: #{tpu_custom_call.1} parent=1 // pred_check_branch
      %518 = sbr.rel (0) target = $region25
    $region24: #{tpu_custom_call.1} parent=1 // pred_region
      %s520 = ssub.s32 256, 256
      %521 = vsyncadd [#allocation4], %s520
      %s522 = sshll.u32 [#allocation5], 4
      %s523 = int_to_ptr.vmem [resolvable:$true] %s522
      %528 = dma.vmem_to_hbm [thread:$0]  %s523, 256, %s4, [#allocation4], 128, 128, 8
    $region25: #{tpu_custom_call.1} parent=1 // pred_fallthru
      _
    // Predicated region
    $region26: #{tpu_custom_call.1} parent=1 // pred_check
      _
    $region27: #{tpu_custom_call.1} parent=1 // pred_check_branch
      %530 = sbr.rel (0) target = $region29
    $region28: #{tpu_custom_call.1} parent=1 // pred_region
      %s532 = ssub.s32 256, 256
      %533 = vsyncadd [#allocation7], %s532
      %s534 = sshll.u32 [#allocation6], 4
      %s535 = int_to_ptr.vmem [resolvable:$true] %s534
      %540 = dma.vmem_to_hbm [thread:$0]  %s535, 256, %s5, [#allocation7], 128, 128, 8
    $region29: #{tpu_custom_call.1} parent=1 // pred_fallthru
      _
    // Predicated region
    $region30: #{tpu_custom_call.1} parent=1 // pred_check
      _
    $region31: #{tpu_custom_call.1} parent=1 // pred_check_branch
      %542 = sbr.rel (0) target = $region33
    $region32: #{tpu_custom_call.1} parent=1 // pred_region
      %543 = dma.done [#allocation4], 256
    $region33: #{tpu_custom_call.1} parent=1 // pred_fallthru
      _
    // Predicated region
    $region34: #{tpu_custom_call.1} parent=1 // pred_check
      _
    $region35: #{tpu_custom_call.1} parent=1 // pred_check_branch
      %545 = sbr.rel (0) target = $region37
    $region36: #{tpu_custom_call.1} parent=1 // pred_region
      %546 = dma.done [#allocation7], 256
    $region37: #{tpu_custom_call.1} parent=1 // pred_fallthru
      _
    %547 = vsyncpa [#allocation3], 1
    %548 = vsyncpa [#allocation4], 1
    %549 = vsyncpa [#allocation7], 1

</llo_original>
